<compile_context>
chip_gen: v6e
topology: v6e:2x2x1
jax: 0.10.0
libtpu: 0.0.40
codegen_flags: <defaults>
</compile_context>

<pallas_src>
import functools

import jax
import jax.numpy as jnp
from jax import lax
from jax.experimental import pallas as pl
from jax.experimental.pallas import tpu as pltpu


def _linear_attention_kernel(x_ref, wqkv_ref, wout_ref, bout_ref, mask_ref,
                             o_ref, *, heads, dim_head, batch_block):
    # x_ref:    (C, N)            [batch dim squeezed]  or (Bt, C, N)
    # wqkv_ref: (3*hidden, C)     -- qkv 1x1 conv weight, natural orientation
    # wout_ref: (dim, hidden)     -- output 1x1 conv weight
    # bout_ref: (dim, 1)          -- output 1x1 conv bias
    # mask_ref: (hidden, hidden)  -- f32 0/1 block-diagonal per-head mask
    # o_ref:    (dim, N)          or (Bt, dim, N)
    hidden = heads * dim_head
    del dim_head  # folded into mask / hidden

    # Weights / bias / mask resident for the whole grid step.
    w_qkv = wqkv_ref[...]
    w_out = wout_ref[...]
    b_out = bout_ref[...]
    head_mask = mask_ref[...]

    def attend_one(x):  # x: (C, N) -> (dim, N)
        # qkv projection (1x1 conv == channel matmul). Natural orientation,
        # contracting ((1,),(0,)) -> plain matmul, no transposes materialized.
        # K = C is tiny and the result feeds exp(), so keep this one in f32.
        qkv = lax.dot_general(w_qkv, x, (((1,), (0,)), ((), ())),
                              preferred_element_type=jnp.float32)  # (3*hidden, N)
        q = qkv[0:hidden]
        k = qkv[hidden:2 * hidden]
        v = qkv[2 * hidden:3 * hidden]

        # softmax over the spatial axis N (torch: k.softmax(dim=-1)), with
        # DEFERRED normalization: Gram runs on unnormalized k_exp (values in
        # (0,1], safe for bf16) and 1/denom is row-folded into gram after.
        k_max = jnp.max(k, axis=-1, keepdims=True)
        k_exp = jnp.exp(k - k_max)
        denom = jnp.sum(k_exp, axis=-1, keepdims=True)       # (hidden, 1)
        inv_denom = pl.reciprocal(denom, approx=True)         # EUP slot

        # All heads at once: gram[d, e] = sum_n k_exp[d, n] * v[e, n]
        # One full-width (hidden x N) x (N x hidden) MXU matmul, bf16 operands,
        # f32 accumulation. Keep only the per-head diagonal blocks and apply
        # the deferred softmax normalization per row.
        gram = lax.dot_general(k_exp.astype(jnp.bfloat16),
                               v.astype(jnp.bfloat16),
                               (((1,), (1,)), ((), ())),
                               preferred_element_type=jnp.float32)  # (hidden, hidden)
        gram = gram * head_mask * inv_denom

        # Fold the output 1x1 conv into the second attention matmul:
        #   w_fold[o, d] = sum_e w_out[o, e] * gram[d, e]
        #   y[o, n]      = sum_d w_fold[o, d] * q[d, n] + b[o]
        w_fold = lax.dot_general(w_out, gram, (((1,), (1,)), ((), ())),
                                 preferred_element_type=jnp.float32)  # (dim, hidden)
        y = lax.dot_general(w_fold.astype(jnp.bfloat16),
                            q.astype(jnp.bfloat16),
                            (((1,), (0,)), ((), ())),
                            preferred_element_type=jnp.float32)        # (dim, N)
        return y + b_out

    if batch_block == 1:
        # Leading batch dim squeezed out of the BlockSpec: straight lane-dense
        # (dim, N) store.
        o_ref[...] = attend_one(x_ref[...]).astype(o_ref.dtype)
    else:
        for bi in range(batch_block):  # static unroll, capped at 4
            o_ref[bi] = attend_one(x_ref[bi]).astype(o_ref.dtype)


def linear_attention(x, w_qkv, w_out, b_out, *, heads, dim_head,
                     batch_block=None):
    """x: (B, C, H, W) float32 (NCHW, dims=2 i.e. Conv2d variant).

    w_qkv: (3*heads*dim_head, C) -- natural 1x1-conv weight orientation.
    w_out: (dim, heads*dim_head), b_out: (dim,).
    """
    B, C, H, W = x.shape
    N = H * W
    hidden = heads * dim_head
    dim = w_out.shape[0]

    # Items-per-grid-step: amortize the ~0.35us per-step overhead at larger B
    # while keeping the unroll small (<=4) and the grid extent >= 2 so both
    # v7x TensorCores get work.
    if batch_block is None:
        batch_block = 1
        if B > 2:
            for cand in (4, 2):
                if B % cand == 0 and B // cand >= 2:
                    batch_block = cand
                    break
    assert B % batch_block == 0, "batch must divide evenly into batch blocks"
    grid = (B // batch_block,)

    x_flat = x.reshape(B, C, N)
    b_out2 = b_out.reshape(dim, 1)

    # Block-diagonal per-head mask, built once on host and kept VMEM-resident
    # (constant index_map -> fetched once).
    head_ids = jnp.arange(hidden, dtype=jnp.int32) // dim_head
    head_mask = (head_ids[:, None] == head_ids[None, :]).astype(jnp.float32)

    if batch_block == 1:
        x_block = (None, C, N)          # None == squeezed leading batch dim
        o_block = (None, dim, N)
    else:
        x_block = (batch_block, C, N)
        o_block = (batch_block, dim, N)

    kernel = functools.partial(_linear_attention_kernel, heads=heads,
                               dim_head=dim_head, batch_block=batch_block)

    out_flat = pl.pallas_call(
        kernel,
        out_shape=jax.ShapeDtypeStruct((B, dim, N), jnp.float32),
        grid_spec=pltpu.PrefetchScalarGridSpec(
            num_scalar_prefetch=0,
            grid=grid,
            in_specs=[
                pl.BlockSpec(x_block, lambda b: (b, 0, 0)),
                pl.BlockSpec((3 * hidden, C), lambda b: (0, 0)),
                pl.BlockSpec((dim, hidden), lambda b: (0, 0)),
                pl.BlockSpec((dim, 1), lambda b: (0, 0)),
                pl.BlockSpec((hidden, hidden), lambda b: (0, 0)),
            ],
            out_specs=pl.BlockSpec(o_block, lambda b: (b, 0, 0)),
        ),
        compiler_params=pltpu.CompilerParams(
            dimension_semantics=("parallel",)),
        # NOTE: at larger H*W, tile N (two-pass/online softmax) or raise
        # vmem_limit_bytes here; not needed at these shapes.
    )(x_flat, w_qkv, w_out, b_out2, head_mask)

    return out_flat.reshape(B, dim, H, W)


def linear_attention_ref(x, w_qkv, w_out, b_out, *, heads, dim_head):
    """Pure-JAX reference mirroring the PyTorch forward."""
    B, C, H, W = x.shape
    N = H * W
    hidden = heads * dim_head
    x_flat = x.reshape(B, C, N)
    qkv = jnp.einsum('oc,bcn->bon', w_qkv, x_flat)            # (B, 3*hidden, N)
    qkv = qkv.reshape(B, 3, heads, dim_head, N)
    q, k, v = qkv[:, 0], qkv[:, 1], qkv[:, 2]                 # (B, heads, dh, N)
    k = jax.nn.softmax(k, axis=-1)
    context = jnp.einsum('bhdn,bhen->bhde', k, v)
    out = jnp.einsum('bhde,bhdn->bhen', context, q)           # (B, heads, dh, N)
    out = out.reshape(B, hidden, N)
    y = jnp.einsum('oc,bcn->bon', w_out, out) + b_out[None, :, None]
    return y.reshape(B, w_out.shape[0], H, W)


if __name__ == "__main__":
    # Module config: dim=4, heads=4, dim_head=32  (Conv2d / dims=2 variant).
    dim, heads, dim_head = 4, 4, 32
    hidden = heads * dim_head
    B, C, H, W = 2, dim, 16, 16

    key = jax.random.PRNGKey(0)
    kx, kw1, kw2, kb = jax.random.split(key, 4)

    x = jax.random.normal(kx, (B, C, H, W), dtype=jnp.float32)
    # Deterministic parameter init (1x1 conv weights squeezed to matrices).
    w_qkv = 0.1 * jax.random.normal(kw1, (3 * hidden, dim), dtype=jnp.float32)
    w_out = 0.1 * jax.random.normal(kw2, (dim, hidden), dtype=jnp.float32)
    b_out = 0.1 * jax.random.normal(kb, (dim,), dtype=jnp.float32)

    out = linear_attention(x, w_qkv, w_out, b_out, heads=heads, dim_head=dim_head)
    out = jax.block_until_ready(out)

    ref = linear_attention_ref(x, w_qkv, w_out, b_out, heads=heads, dim_head=dim_head)
    assert out.shape == (B, dim, H, W)
    # Tolerance relaxed vs. pure-f32: bf16 MXU operands (f32 accumulation),
    # approx EUP reciprocal in the softmax, and the folded/re-associated
    # output conv all perturb f32 rounding slightly.
    assert jnp.allclose(out, ref, atol=5e-3, rtol=5e-3), "mismatch vs reference"

    print("KERNEL_OK")
</pallas_src>

<mosaic_0001>
module attributes {stable_mosaic.version = 11 : i64} {
  func.func @_linear_attention_kernel(%arg0: i32, %arg1: memref<1x4x256xf32, #tpu.memory_space<vmem>>, %arg2: memref<384x4xf32, #tpu.memory_space<vmem>>, %arg3: memref<4x128xf32, #tpu.memory_space<vmem>>, %arg4: memref<4x1xf32, #tpu.memory_space<vmem>>, %arg5: memref<128x128xf32, #tpu.memory_space<vmem>>, %arg6: memref<1x4x256xf32, #tpu.memory_space<vmem>>) attributes {dimension_semantics = [#tpu.dimension_semantics<parallel>], iteration_bounds = array<i64: 2>, scalar_prefetch = 0 : i64, scratch_operands = 0 : i64, tpu.core_type = #tpu.core_type<tc>, window_params = [{transform_indices = @transform_0, window_bounds = array<i64: 1, 4, 256>}, {pipeline_mode = #tpu.pipeline_mode<synchronous>, transform_indices = @transform_1, window_bounds = array<i64: 384, 4>}, {pipeline_mode = #tpu.pipeline_mode<synchronous>, transform_indices = @transform_2, window_bounds = array<i64: 4, 128>}, {pipeline_mode = #tpu.pipeline_mode<synchronous>, transform_indices = @transform_3, window_bounds = array<i64: 4, 1>}, {pipeline_mode = #tpu.pipeline_mode<synchronous>, transform_indices = @transform_4, window_bounds = array<i64: 128, 128>}, {transform_indices = @transform_5, window_bounds = array<i64: 1, 4, 256>}]} {
    %c0 = arith.constant 0 : index
    %c0_0 = arith.constant 0 : index
    %0 = vector.load %arg2[%c0, %c0_0] : memref<384x4xf32, #tpu.memory_space<vmem>>, vector<384x4xf32>
    %c0_1 = arith.constant 0 : index
    %c0_2 = arith.constant 0 : index
    %1 = vector.load %arg3[%c0_1, %c0_2] : memref<4x128xf32, #tpu.memory_space<vmem>>, vector<4x128xf32>
    %c0_3 = arith.constant 0 : index
    %c0_4 = arith.constant 0 : index
    %2 = vector.load %arg4[%c0_3, %c0_4] : memref<4x1xf32, #tpu.memory_space<vmem>>, vector<4x1xf32>
    %c0_5 = arith.constant 0 : index
    %c0_6 = arith.constant 0 : index
    %3 = vector.load %arg5[%c0_5, %c0_6] : memref<128x128xf32, #tpu.memory_space<vmem>>, vector<128x128xf32>
    %c0_7 = arith.constant 0 : index
    %c0_8 = arith.constant 0 : index
    %c0_9 = arith.constant 0 : index
    %4 = vector.load %arg1[%c0_7, %c0_8, %c0_9] : memref<1x4x256xf32, #tpu.memory_space<vmem>>, vector<1x4x256xf32>
    %5 = vector.shape_cast %4 : vector<1x4x256xf32> to vector<4x256xf32>
    %cst = arith.constant dense<0.000000e+00> : vector<384x256xf32>
    %6 = tpu.matmul %0, %5, %cst {dimension_numbers = #tpu.dot_dimension_numbers<[1], [0], [0], [1], [0, 0, 1, 1], [], []>} : vector<384x4xf32>, vector<4x256xf32>, vector<384x256xf32> -> vector<384x256xf32>
    %7 = vector.extract_strided_slice %6 {offsets = [0, 0], sizes = [128, 256], strides = [1, 1]} : vector<384x256xf32> to vector<128x256xf32>
    %8 = vector.extract_strided_slice %6 {offsets = [128, 0], sizes = [128, 256], strides = [1, 1]} : vector<384x256xf32> to vector<128x256xf32>
    %9 = vector.extract_strided_slice %6 {offsets = [256, 0], sizes = [128, 256], strides = [1, 1]} : vector<384x256xf32> to vector<128x256xf32>
    %cst_10 = arith.constant dense<0xFF800000> : vector<128xf32>
    %10 = vector.multi_reduction <maximumf>, %8, %cst_10 [1] : vector<128x256xf32> to vector<128xf32>
    %11 = vector.shape_cast %10 : vector<128xf32> to vector<128x1xf32>
    %12 = vector.broadcast %11 : vector<128x1xf32> to vector<128x256xf32>
    %13 = arith.subf %8, %12 : vector<128x256xf32>
    %14 = math.exp %13 : vector<128x256xf32>
    %cst_11 = arith.constant dense<0.000000e+00> : vector<128xf32>
    %15 = vector.multi_reduction <add>, %14, %cst_11 [1] : vector<128x256xf32> to vector<128xf32>
    %16 = vector.shape_cast %15 : vector<128xf32> to vector<128x1xf32>
    %17 = tpu.reciprocal %16 {approx = true} : vector<128x1xf32> -> vector<128x1xf32>
    %18 = arith.truncf %14 : vector<128x256xf32> to vector<128x256xbf16>
    %19 = arith.truncf %9 : vector<128x256xf32> to vector<128x256xbf16>
    %cst_12 = arith.constant dense<0.000000e+00> : vector<128x128xf32>
    %20 = tpu.matmul %18, %19, %cst_12 {dimension_numbers = #tpu.dot_dimension_numbers<[1], [1], [0], [0], [0, 0, 1, 0], [], []>} : vector<128x256xbf16>, vector<128x256xbf16>, vector<128x128xf32> -> vector<128x128xf32>
    %21 = arith.mulf %20, %3 : vector<128x128xf32>
    %22 = vector.broadcast %17 : vector<128x1xf32> to vector<128x128xf32>
    %23 = arith.mulf %21, %22 : vector<128x128xf32>
    %cst_13 = arith.constant dense<0.000000e+00> : vector<4x128xf32>
    %24 = tpu.matmul %1, %23, %cst_13 {dimension_numbers = #tpu.dot_dimension_numbers<[1], [1], [0], [0], [0, 0, 1, 0], [], []>} : vector<4x128xf32>, vector<128x128xf32>, vector<4x128xf32> -> vector<4x128xf32>
    %25 = arith.truncf %24 : vector<4x128xf32> to vector<4x128xbf16>
    %26 = arith.truncf %7 : vector<128x256xf32> to vector<128x256xbf16>
    %cst_14 = arith.constant dense<0.000000e+00> : vector<4x256xf32>
    %27 = tpu.matmul %25, %26, %cst_14 {dimension_numbers = #tpu.dot_dimension_numbers<[1], [0], [0], [1], [0, 0, 1, 1], [], []>} : vector<4x128xbf16>, vector<128x256xbf16>, vector<4x256xf32> -> vector<4x256xf32>
    %28 = vector.broadcast %2 : vector<4x1xf32> to vector<4x256xf32>
    %29 = arith.addf %27, %28 : vector<4x256xf32>
    %c0_15 = arith.constant 0 : index
    %c0_16 = arith.constant 0 : index
    %c0_17 = arith.constant 0 : index
    %30 = vector.load %arg6[%c0_15, %c0_16, %c0_17] : memref<1x4x256xf32, #tpu.memory_space<vmem>>, vector<1x4x256xf32>
    %31 = vector.shape_cast %30 : vector<1x4x256xf32> to vector<4x256xf32>
    %32 = vector.shape_cast %29 : vector<4x256xf32> to vector<1x4x256xf32>
    tpu.vector_store %arg6[%c0_15, %c0_16, %c0_17], %32 {strides = array<i32>} : memref<1x4x256xf32, #tpu.memory_space<vmem>>, vector<1x4x256xf32>,
    return
  }
  func.func @transform_0(%arg0: i32) -> (i32, i32, i32) {
    %c0_i32 = arith.constant 0 : i32
    %c0_i32_0 = arith.constant 0 : i32
    %c0_i32_1 = arith.constant 0 : i32
    return %arg0, %c0_i32, %c0_i32_0 : i32, i32, i32
  }
  func.func @transform_1(%arg0: i32) -> (i32, i32) {
    %c0_i32 = arith.constant 0 : i32
    %c0_i32_0 = arith.constant 0 : i32
    %c0_i32_1 = arith.constant 0 : i32
    return %c0_i32, %c0_i32_0 : i32, i32
  }
  func.func @transform_2(%arg0: i32) -> (i32, i32) {
    %c0_i32 = arith.constant 0 : i32
    %c0_i32_0 = arith.constant 0 : i32
    %c0_i32_1 = arith.constant 0 : i32
    return %c0_i32, %c0_i32_0 : i32, i32
  }
  func.func @transform_3(%arg0: i32) -> (i32, i32) {
    %c0_i32 = arith.constant 0 : i32
    %c0_i32_0 = arith.constant 0 : i32
    %c0_i32_1 = arith.constant 0 : i32
    return %c0_i32, %c0_i32_0 : i32, i32
  }
  func.func @transform_4(%arg0: i32) -> (i32, i32) {
    %c0_i32 = arith.constant 0 : i32
    %c0_i32_0 = arith.constant 0 : i32
    %c0_i32_1 = arith.constant 0 : i32
    return %c0_i32, %c0_i32_0 : i32, i32
  }
  func.func @transform_5(%arg0: i32) -> (i32, i32, i32) {
    %c0_i32 = arith.constant 0 : i32
    %c0_i32_0 = arith.constant 0 : i32
    %c0_i32_1 = arith.constant 0 : i32
    return %arg0, %c0_i32, %c0_i32_0 : i32, i32, i32
  }
}

</mosaic_0001>

<llo_original>
// kernel: tpu_custom_call.1
$region0: #{tpu_custom_call.1}
  #allocation0 [shape = 'u32[]', space=smem, size = 0x4, offset = 0x4, fixed_abs, tag = 'smem constant byte address 0x4 - core index']
  #allocation1 [shape = 'u32[144,128]{1,0:T(1,128)}', space=vmem, size = 0x12000, scoped, tag = 'internal scratch']
  %s0 = inlined_call_operand.vmem [shape: f32[2,4,256], index: 0, kind: input, shape index: {}]
  %s1 = inlined_call_operand.vmem [shape: f32[384,4], index: 1, kind: input, shape index: {}]
  %s2 = inlined_call_operand.vmem [shape: f32[4,128], index: 2, kind: input, shape index: {}]
  %s3 = inlined_call_operand.vmem [shape: f32[4,1], index: 3, kind: input, shape index: {}]
  %s4 = inlined_call_operand.vmem [shape: f32[128,128], index: 4, kind: input, shape index: {}]
  %s5 = inlined_call_operand.hbm [shape: f32[2,4,256], index: 5, kind: output, shape index: {}]
  %s6 = sld [smem:[#allocation0]]
  $region53: #{tpu_custom_call.1} parent=0
    _
  %s8 = ssub.s32 1, %s6
  %s9 = scalar_select 0, %s8, %s6
  $region1: #{tpu_custom_call.1} parent=0
    #allocation2 [shape = 'u8[8192]{0}', space=vmem, size = 0x2000, scoped, tag = 'output window, operand 0']
    #allocation3 [shape = 's32[2]{0}', space=sflag, size = 0x8, scoped, tag = 'scoped memory for tpu_custom_call.1']
    %10 = vsyncpa [#allocation3], 0
    %s11 = scalar_lea.sflag [#allocation3], 1
    %12 = vsyncpa %s11, 0
    loop: start=0, step=1, limit=4
    $region2: #{tpu_custom_call.1} parent=1 // loop_pre_header
      _
    $region3: #{tpu_custom_call.1} parent=1 // loop_header
      %s14 = sphi 0, %s18
      %p15 = scmp.ge.s32.totalorder %s14, 4
      %s24 = sphi 0, %s26
      %s27 = sphi 0, %s24
      %s28 = sphi 0, %s27
      %s44 = sphi 0, %s28
      %s48 = sphi 0, %s48
      %s50 = sphi 0, %s48
      %s51 = sphi 0, %s50
      %s65 = sphi 0, %s51
      %s69 = sphi 0, %s69
      %s71 = sphi 0, %s69
      %s72 = sphi 0, %s71
      %s86 = sphi 0, %s72
      %s90 = sphi 0, %s90
      %s92 = sphi 0, %s90
      %s93 = sphi 0, %s92
      %s107 = sphi 0, %s93
      %s111 = sphi 0, %s111
      %s113 = sphi 0, %s111
      %s114 = sphi 0, %s113
      %s128 = sphi 0, %s114
      %s134 = sphi 0, %s136
      %s137 = sphi 0, %s134
      %s138 = sphi 0, %s137
      %s154 = sphi 0, %s138
    $region4: #{tpu_custom_call.1} parent=1 // loop_header_branch
      %17 = sbr.rel (%p15) target = $region8
    $region5: #{tpu_custom_call.1} parent=1 // loop_body
      %s19 = ssub.s32 %s14, 1
      %s20 = ssub.s32 %s14, 2
      %s21 = sadd.s32 %s14, 1
      %s22 = ssub.s32 %s14, %s21
      %p23 = scmp.eq.s32.totalorder %s22, 0
      %s25 = sadd.s32 %s24, 1
      %s26 = scalar_select %p23, %s24, %s25
      %p29 = pneg %p23
      %p30 = scmp.eq.s32.totalorder %s14, 1
      %p31 = por %p29, %p30
      %p32 = scmp.ne.s32.totalorder %s24, %s27
      %p33 = scmp.eq.s32.totalorder %s14, 0
      %p34 = por %p32, %p33
      %p35 = scmp.ne.s32.totalorder %s24, %s27
      %p36 = scmp.eq.s32.totalorder %s19, 1
      %p37 = por %p35, %p36
      %p38 = scmp.ne.s32.totalorder %s27, %s28
      %p39 = scmp.eq.s32.totalorder %s19, 0
      %p40 = por %p38, %p39
      %p41 = scmp.ne.s32.totalorder %s27, %s28
      %p42 = scmp.eq.s32.totalorder %s20, 1
      %p43 = por %p41, %p42
      %p45 = scmp.ne.s32.totalorder %s28, %s44
      %p46 = scmp.eq.s32.totalorder %s20, 0
      %p47 = por %p45, %p46
      %s49 = sadd.s32 %s48, 1
      %p52 = scmp.eq.s32.totalorder %s14, 1
      %p53 = scmp.ne.s32.totalorder %s48, %s50
      %p54 = scmp.eq.s32.totalorder %s14, 0
      %p55 = por %p53, %p54
      %p56 = scmp.ne.s32.totalorder %s48, %s50
      %p57 = scmp.eq.s32.totalorder %s19, 1
      %p58 = por %p56, %p57
      %p59 = scmp.ne.s32.totalorder %s50, %s51
      %p60 = scmp.eq.s32.totalorder %s19, 0
      %p61 = por %p59, %p60
      %p62 = scmp.ne.s32.totalorder %s50, %s51
      %p63 = scmp.eq.s32.totalorder %s20, 1
      %p64 = por %p62, %p63
      %p66 = scmp.ne.s32.totalorder %s51, %s65
      %p67 = scmp.eq.s32.totalorder %s20, 0
      %p68 = por %p66, %p67
      %s70 = sadd.s32 %s69, 1
      %p73 = scmp.eq.s32.totalorder %s14, 1
      %p74 = scmp.ne.s32.totalorder %s69, %s71
      %p75 = scmp.eq.s32.totalorder %s14, 0
      %p76 = por %p74, %p75
      %p77 = scmp.ne.s32.totalorder %s69, %s71
      %p78 = scmp.eq.s32.totalorder %s19, 1
      %p79 = por %p77, %p78
      %p80 = scmp.ne.s32.totalorder %s71, %s72
      %p81 = scmp.eq.s32.totalorder %s19, 0
      %p82 = por %p80, %p81
      %p83 = scmp.ne.s32.totalorder %s71, %s72
      %p84 = scmp.eq.s32.totalorder %s20, 1
      %p85 = por %p83, %p84
      %p87 = scmp.ne.s32.totalorder %s72, %s86
      %p88 = scmp.eq.s32.totalorder %s20, 0
      %p89 = por %p87, %p88
      %s91 = sadd.s32 %s90, 1
      %p94 = scmp.eq.s32.totalorder %s14, 1
      %p95 = scmp.ne.s32.totalorder %s90, %s92
      %p96 = scmp.eq.s32.totalorder %s14, 0
      %p97 = por %p95, %p96
      %p98 = scmp.ne.s32.totalorder %s90, %s92
      %p99 = scmp.eq.s32.totalorder %s19, 1
      %p100 = por %p98, %p99
      %p101 = scmp.ne.s32.totalorder %s92, %s93
      %p102 = scmp.eq.s32.totalorder %s19, 0
      %p103 = por %p101, %p102
      %p104 = scmp.ne.s32.totalorder %s92, %s93
      %p105 = scmp.eq.s32.totalorder %s20, 1
      %p106 = por %p104, %p105
      %p108 = scmp.ne.s32.totalorder %s93, %s107
      %p109 = scmp.eq.s32.totalorder %s20, 0
      %p110 = por %p108, %p109
      %s112 = sadd.s32 %s111, 1
      %p115 = scmp.eq.s32.totalorder %s14, 1
      %p116 = scmp.ne.s32.totalorder %s111, %s113
      %p117 = scmp.eq.s32.totalorder %s14, 0
      %p118 = por %p116, %p117
      %p119 = scmp.ne.s32.totalorder %s111, %s113
      %p120 = scmp.eq.s32.totalorder %s19, 1
      %p121 = por %p119, %p120
      %p122 = scmp.ne.s32.totalorder %s113, %s114
      %p123 = scmp.eq.s32.totalorder %s19, 0
      %p124 = por %p122, %p123
      %p125 = scmp.ne.s32.totalorder %s113, %s114
      %p126 = scmp.eq.s32.totalorder %s20, 1
      %p127 = por %p125, %p126
      %p129 = scmp.ne.s32.totalorder %s114, %s128
      %p130 = scmp.eq.s32.totalorder %s20, 0
      %p131 = por %p129, %p130
      %s132 = ssub.s32 %s14, %s21
      %p133 = scmp.eq.s32.totalorder %s132, 0
      %s135 = sadd.s32 %s134, 1
      %s136 = scalar_select %p133, %s134, %s135
      %p139 = pneg %p133
      %p140 = scmp.eq.s32.totalorder %s14, 1
      %p141 = por %p139, %p140
      %p142 = scmp.ne.s32.totalorder %s134, %s137
      %p143 = scmp.eq.s32.totalorder %s14, 0
      %p144 = por %p142, %p143
      %p145 = scmp.ne.s32.totalorder %s134, %s137
      %p146 = scmp.eq.s32.totalorder %s19, 1
      %p147 = por %p145, %p146
      %p148 = scmp.ne.s32.totalorder %s137, %s138
      %p149 = scmp.eq.s32.totalorder %s19, 0
      %p150 = por %p148, %p149
      %p151 = scmp.ne.s32.totalorder %s137, %s138
      %p152 = scmp.eq.s32.totalorder %s20, 1
      %p153 = por %p151, %p152
      %p155 = scmp.ne.s32.totalorder %s138, %s154
      %p156 = scmp.eq.s32.totalorder %s20, 0
      %p157 = por %p155, %p156
      %p158 = scmp.le.s32.totalorder 1, %s14
      %p159 = scmp.lt.s32.totalorder %s14, 3
      %p160 = pnand %p158, %p159
      %p161 = pneg %p160
      // Predicated region
      $region9: #{tpu_custom_call.1} parent=5 // pred_check
        _
      $region10: #{tpu_custom_call.1} parent=5 // pred_check_branch
        %163 = sbr.rel (%p160) target = $region12
      $region11: #{tpu_custom_call.1} parent=5 // pred_region
        %s164 = ssub.s32 %s14, 1
        // Predicated region
        $region13: #{tpu_custom_call.1} parent=11 // pred_check
          %p165 = pneg %p61
        $region14: #{tpu_custom_call.1} parent=11 // pred_check_branch
          %167 = sbr.rel (%p165) target = $region16
        $region15: #{tpu_custom_call.1} parent=11 // pred_region
          _
        $region16: #{tpu_custom_call.1} parent=11 // pred_fallthru
          _
        // Predicated region
        $region17: #{tpu_custom_call.1} parent=11 // pred_check
          %p168 = pneg %p82
        $region18: #{tpu_custom_call.1} parent=11 // pred_check_branch
          %170 = sbr.rel (%p168) target = $region20
        $region19: #{tpu_custom_call.1} parent=11 // pred_region
          _
        $region20: #{tpu_custom_call.1} parent=11 // pred_fallthru
          _
        // Predicated region
        $region21: #{tpu_custom_call.1} parent=11 // pred_check
          %p171 = pneg %p103
        $region22: #{tpu_custom_call.1} parent=11 // pred_check_branch
          %173 = sbr.rel (%p171) target = $region24
        $region23: #{tpu_custom_call.1} parent=11 // pred_region
          _
        $region24: #{tpu_custom_call.1} parent=11 // pred_fallthru
          _
        // Predicated region
        $region25: #{tpu_custom_call.1} parent=11 // pred_check
          %p174 = pneg %p124
        $region26: #{tpu_custom_call.1} parent=11 // pred_check_branch
          %176 = sbr.rel (%p174) target = $region28
        $region27: #{tpu_custom_call.1} parent=11 // pred_region
          _
        $region28: #{tpu_custom_call.1} parent=11 // pred_fallthru
          _
      $region12: #{tpu_custom_call.1} parent=5 // pred_fallthru
        _
      %p177 = scmp.lt.s32.totalorder %s14, 2
      // Predicated region
      $region29: #{tpu_custom_call.1} parent=5 // pred_check
        %p178 = pneg %p177
      $region30: #{tpu_custom_call.1} parent=5 // pred_check_branch
        %180 = sbr.rel (%p178) target = $region32
      $region31: #{tpu_custom_call.1} parent=5 // pred_region
        // Predicated region
        $region33: #{tpu_custom_call.1} parent=31 // pred_check
          %p181 = pneg %p34
        $region34: #{tpu_custom_call.1} parent=31 // pred_check_branch
          %183 = sbr.rel (%p181) target = $region36
        $region35: #{tpu_custom_call.1} parent=31 // pred_region
          %p184 = scmp.lt.s32.totalorder %s14, 1
          %s185 = scalar_select %p184, %s14, 1
          %s186 = smul.addr %s185, 2
          %s187 = smul.addr %s186, 4
          %s188 = scalar_lea.vmem %s0, %s187
        $region36: #{tpu_custom_call.1} parent=31 // pred_fallthru
          _
      $region32: #{tpu_custom_call.1} parent=5 // pred_fallthru
        _
      %p189 = scmp.le.s32.totalorder 1, %s14
      %p190 = scmp.lt.s32.totalorder %s14, 3
      %p191 = pnand %p189, %p190
      %p192 = pneg %p191
      // Predicated region
      $region37: #{tpu_custom_call.1} parent=5 // pred_check
        _
      $region38: #{tpu_custom_call.1} parent=5 // pred_check_branch
        %194 = sbr.rel (%p191) target = $region40
      $region39: #{tpu_custom_call.1} parent=5 // pred_region
        %s195 = ssub.s32 %s14, 1
        %p196 = scmp.lt.s32.totalorder %s19, 1
        %s197 = scalar_select %p196, %s19, 1
        %s198 = smul.addr %s197, 2
        %s199 = smul.addr %s198, 4
        %s200 = scalar_lea.vmem %s0, %s199
        %p201 = pneg %p40
        %p202 = pneg %p37
        %p203 = pneg %p61
        %p204 = pneg %p58
        %p205 = pneg %p82
        %p206 = pneg %p79
        %p207 = pneg %p103
        %p208 = pneg %p100
        %p209 = pneg %p124
        %p210 = pneg %p121
        %p211 = pneg %p150
        %p212 = pneg %p147
        %s213 = sand.u32 %s137, 1
        %s214 = scalar_lea.sflag [#allocation3], %s213
        %s215 = sand.u32 %s137, 1
        %s216 = smul.addr %s215, 8
        %s217 = scalar_lea.vmem [#allocation2], %s216
        %p218 = scmp.lt.s32.totalorder %s19, 1
        %s219 = scalar_select %p218, %s19, 1
        %s220 = smul.addr %s219, 2
        %s221 = smul.addr %s220, 4
        %s222 = scalar_lea.vmem %s0, %s221
        %v224 = vld [vmem:[%s1] sm:$0xff]
        %v225 = vld [vmem:[%s1 + $0x8] sm:$0xff]
        %v226 = vld [vmem:[%s1 + $0x10] sm:$0xff]
        %v227 = vld [vmem:[%s1 + $0x18] sm:$0xff]
        %v228 = vld [vmem:[%s1 + $0x20] sm:$0xff]
        %v229 = vld [vmem:[%s1 + $0x28] sm:$0xff]
        %v230 = vld [vmem:[%s1 + $0x30] sm:$0xff]
        %v231 = vld [vmem:[%s1 + $0x38] sm:$0xff]
        %v232 = vld [vmem:[%s1 + $0x40] sm:$0xff]
        %v233 = vld [vmem:[%s1 + $0x48] sm:$0xff]
        %v234 = vld [vmem:[%s1 + $0x50] sm:$0xff]
        %v235 = vld [vmem:[%s1 + $0x58] sm:$0xff]
        %v236 = vld [vmem:[%s1 + $0x60] sm:$0xff]
        %v237 = vld [vmem:[%s1 + $0x68] sm:$0xff]
        %v238 = vld [vmem:[%s1 + $0x70] sm:$0xff]
        %v239 = vld [vmem:[%s1 + $0x78] sm:$0xff]
        %v240 = vld [vmem:[%s1 + $0x80] sm:$0xff]
        %v241 = vld [vmem:[%s1 + $0x88] sm:$0xff]
        %v242 = vld [vmem:[%s1 + $0x90] sm:$0xff]
        %v243 = vld [vmem:[%s1 + $0x98] sm:$0xff]
        %v244 = vld [vmem:[%s1 + $0xa0] sm:$0xff]
        %v245 = vld [vmem:[%s1 + $0xa8] sm:$0xff]
        %v246 = vld [vmem:[%s1 + $0xb0] sm:$0xff]
        %v247 = vld [vmem:[%s1 + $0xb8] sm:$0xff]
        %v248 = vld [vmem:[%s1 + $0xc0] sm:$0xff]
        %v249 = vld [vmem:[%s1 + $0xc8] sm:$0xff]
        %v250 = vld [vmem:[%s1 + $0xd0] sm:$0xff]
        %v251 = vld [vmem:[%s1 + $0xd8] sm:$0xff]
        %v252 = vld [vmem:[%s1 + $0xe0] sm:$0xff]
        %v253 = vld [vmem:[%s1 + $0xe8] sm:$0xff]
        %v254 = vld [vmem:[%s1 + $0xf0] sm:$0xff]
        %v255 = vld [vmem:[%s1 + $0xf8] sm:$0xff]
        %v256 = vld [vmem:[%s1 + $0x100] sm:$0xff]
        %v257 = vld [vmem:[%s1 + $0x108] sm:$0xff]
        %v258 = vld [vmem:[%s1 + $0x110] sm:$0xff]
        %v259 = vld [vmem:[%s1 + $0x118] sm:$0xff]
        %v260 = vld [vmem:[%s1 + $0x120] sm:$0xff]
        %v261 = vld [vmem:[%s1 + $0x128] sm:$0xff]
        %v262 = vld [vmem:[%s1 + $0x130] sm:$0xff]
        %v263 = vld [vmem:[%s1 + $0x138] sm:$0xff]
        %v264 = vld [vmem:[%s1 + $0x140] sm:$0xff]
        %v265 = vld [vmem:[%s1 + $0x148] sm:$0xff]
        %v266 = vld [vmem:[%s1 + $0x150] sm:$0xff]
        %v267 = vld [vmem:[%s1 + $0x158] sm:$0xff]
        %v268 = vld [vmem:[%s1 + $0x160] sm:$0xff]
        %v269 = vld [vmem:[%s1 + $0x168] sm:$0xff]
        %v270 = vld [vmem:[%s1 + $0x170] sm:$0xff]
        %v271 = vld [vmem:[%s1 + $0x178] sm:$0xff]
        %v272 = vld [vmem:[%s2] sm:$0xf]
        %v273 = vld [vmem:[%s3] sm:$0xf]
        %v274 = vld [vmem:[%s4] sm:$0xff]
        %v275 = vld [vmem:[%s4 + $0x8] sm:$0xff]
        %v276 = vld [vmem:[%s4 + $0x10] sm:$0xff]
        %v277 = vld [vmem:[%s4 + $0x18] sm:$0xff]
        %v278 = vld [vmem:[%s4 + $0x20] sm:$0xff]
        %v279 = vld [vmem:[%s4 + $0x28] sm:$0xff]
        %v280 = vld [vmem:[%s4 + $0x30] sm:$0xff]
        %v281 = vld [vmem:[%s4 + $0x38] sm:$0xff]
        %v282 = vld [vmem:[%s4 + $0x40] sm:$0xff]
        %v283 = vld [vmem:[%s4 + $0x48] sm:$0xff]
        %v284 = vld [vmem:[%s4 + $0x50] sm:$0xff]
        %v285 = vld [vmem:[%s4 + $0x58] sm:$0xff]
        %v286 = vld [vmem:[%s4 + $0x60] sm:$0xff]
        %v287 = vld [vmem:[%s4 + $0x68] sm:$0xff]
        %v288 = vld [vmem:[%s4 + $0x70] sm:$0xff]
        %v289 = vld [vmem:[%s4 + $0x78] sm:$0xff]
        %v290 = vld [vmem:[%s222] sm:$0xff]
        %v292 = vcombine.high %v290, %v290
        %vm293 = vcmask 31744
        %v295 = vsel %vm293, %v224, 0
        %v298 = vsel %vm293, %v225, 0
        %v301 = vsel %vm293, %v226, 0
        %v304 = vsel %vm293, %v227, 0
        %v307 = vsel %vm293, %v228, 0
        %v310 = vsel %vm293, %v229, 0
        %v313 = vsel %vm293, %v230, 0
        %v316 = vsel %vm293, %v231, 0
        %v319 = vsel %vm293, %v232, 0
        %v322 = vsel %vm293, %v233, 0
        %v325 = vsel %vm293, %v234, 0
        %v328 = vsel %vm293, %v235, 0
        %v331 = vsel %vm293, %v236, 0
        %v334 = vsel %vm293, %v237, 0
        %v337 = vsel %vm293, %v238, 0
        %v340 = vsel %vm293, %v239, 0
        %v343 = vsel %vm293, %v240, 0
        %v346 = vsel %vm293, %v241, 0
        %v349 = vsel %vm293, %v242, 0
        %v352 = vsel %vm293, %v243, 0
        %v355 = vsel %vm293, %v244, 0
        %v358 = vsel %vm293, %v245, 0
        %v361 = vsel %vm293, %v246, 0
        %v364 = vsel %vm293, %v247, 0
        %v367 = vsel %vm293, %v248, 0
        %v370 = vsel %vm293, %v249, 0
        %v373 = vsel %vm293, %v250, 0
        %v376 = vsel %vm293, %v251, 0
        %v379 = vsel %vm293, %v252, 0
        %v382 = vsel %vm293, %v253, 0
        %v385 = vsel %vm293, %v254, 0
        %v388 = vsel %vm293, %v255, 0
        %v391 = vsel %vm293, %v256, 0
        %v394 = vsel %vm293, %v257, 0
        %v397 = vsel %vm293, %v258, 0
        %v400 = vsel %vm293, %v259, 0
        %v403 = vsel %vm293, %v260, 0
        %v406 = vsel %vm293, %v261, 0
        %v409 = vsel %vm293, %v262, 0
        %v412 = vsel %vm293, %v263, 0
        %v415 = vsel %vm293, %v264, 0
        %v418 = vsel %vm293, %v265, 0
        %v421 = vsel %vm293, %v266, 0
        %v424 = vsel %vm293, %v267, 0
        %v427 = vsel %vm293, %v268, 0
        %v430 = vsel %vm293, %v269, 0
        %v433 = vsel %vm293, %v270, 0
        %v436 = vsel %vm293, %v271, 0
        %vm438 = vcmask 1043456
        %v439 = vsel %vm438, %v290, 0
        %v441 = vsel %vm438, %v292, 0
        %443 = vmatprep.subr.mxu0 0.0
        %444 = vmatpush1.msra.mxu0 0.0
        %445 = vmatprep.subr.mxu0 0.0
        %446 = vmatpush1.msra.mxu0 0.0
        %447 = vmatprep.subr.mxu0 0.0
        %448 = vmatpush1.msra.mxu0 0.0
        %449 = vmatprep.subr.mxu0 0.0
        %450 = vmatpush1.msra.mxu0 0.0
        %451 = vmatprep.subr.mxu0 0.0
        %452 = vmatpush1.msra.mxu0 0.0
        %453 = vmatprep.subr.mxu0 0.0
        %454 = vmatpush1.msra.mxu0 0.0
        %455 = vmatprep.subr.mxu0 0.0
        %456 = vmatpush1.msra.mxu0 0.0
        %457 = vmatprep.subr.mxu0 0.0
        %458 = vmatpush1.msra.mxu0 0.0
        %459 = vmatprep.subr.mxu0 0.0
        %460 = vmatpush1.msra.mxu0 0.0
        %461 = vmatprep.subr.mxu0 0.0
        %462 = vmatpush1.msra.mxu0 0.0
        %463 = vmatprep.subr.mxu0 0.0
        %464 = vmatpush1.msra.mxu0 0.0
        %465 = vmatprep.subr.mxu0 0.0
        %466 = vmatpush1.msra.mxu0 0.0
        %467 = vmatprep.subr.mxu0 0.0
        %468 = vmatpush1.msra.mxu0 0.0
        %469 = vmatprep.subr.mxu0 0.0
        %470 = vmatpush1.msra.mxu0 0.0
        %471 = vmatprep.subr.mxu0 0.0
        %472 = vmatpush1.msra.mxu0 0.0
        %473 = vmatprep.subr.mxu0 %v441
        %474 = vmatpush1.msra.mxu0 %v439
        %475 = vmatprep.subr.mxu0 0.0
        %476 = vmatpush2.msra.mxu0 0.0
        %477 = vmatprep.subr.mxu0 0.0
        %478 = vmatpush2.msra.mxu0 0.0
        %479 = vmatprep.subr.mxu0 0.0
        %480 = vmatpush2.msra.mxu0 0.0
        %481 = vmatprep.subr.mxu0 0.0
        %482 = vmatpush2.msra.mxu0 0.0
        %483 = vmatprep.subr.mxu0 0.0
        %484 = vmatpush2.msra.mxu0 0.0
        %485 = vmatprep.subr.mxu0 0.0
        %486 = vmatpush2.msra.mxu0 0.0
        %487 = vmatprep.subr.mxu0 0.0
        %488 = vmatpush2.msra.mxu0 0.0
        %489 = vmatprep.subr.mxu0 0.0
        %490 = vmatpush2.msra.mxu0 0.0
        %491 = vmatprep.subr.mxu0 0.0
        %492 = vmatpush2.msra.mxu0 0.0
        %493 = vmatprep.subr.mxu0 0.0
        %494 = vmatpush2.msra.mxu0 0.0
        %495 = vmatprep.subr.mxu0 0.0
        %496 = vmatpush2.msra.mxu0 0.0
        %497 = vmatprep.subr.mxu0 0.0
        %498 = vmatpush2.msra.mxu0 0.0
        %499 = vmatprep.subr.mxu0 0.0
        %500 = vmatpush2.msra.mxu0 0.0
        %501 = vmatprep.subr.mxu0 0.0
        %502 = vmatpush2.msra.mxu0 0.0
        %503 = vmatprep.subr.mxu0 0.0
        %504 = vmatpush2.msra.mxu0 0.0
        %505 = vmatprep.subr.mxu0 0.0
        %506 = vmatpush2.msra.mxu0 0.0
        %507 = vmatprep.mubr.f32.mxu0 0.0
        %508 = vmatmul.mubr.f32.gmra.mxu0 %v295
        %v509 = vpop.f32.mrf.mxu0
        %v510 = vadd.f32 0.0, %v509
        %v511 = vpop.f32.mrf.mxu0
        %v512 = vadd.f32 0.0, %v511
        %513 = vmatprep.mubr.f32.mxu0 0.0
        %514 = vmatmul.mubr.f32.gmra.mxu0 %v298
        %v515 = vpop.f32.mrf.mxu0
        %v516 = vadd.f32 0.0, %v515
        %v517 = vpop.f32.mrf.mxu0
        %v518 = vadd.f32 0.0, %v517
        %519 = vmatprep.mubr.f32.mxu0 0.0
        %520 = vmatmul.mubr.f32.gmra.mxu0 %v301
        %v521 = vpop.f32.mrf.mxu0
        %v522 = vadd.f32 0.0, %v521
        %v523 = vpop.f32.mrf.mxu0
        %v524 = vadd.f32 0.0, %v523
        %525 = vmatprep.mubr.f32.mxu0 0.0
        %526 = vmatmul.mubr.f32.gmra.mxu0 %v304
        %v527 = vpop.f32.mrf.mxu0
        %v528 = vadd.f32 0.0, %v527
        %v529 = vpop.f32.mrf.mxu0
        %v530 = vadd.f32 0.0, %v529
        %531 = vmatprep.mubr.f32.mxu0 0.0
        %532 = vmatmul.mubr.f32.gmra.mxu0 %v307
        %v533 = vpop.f32.mrf.mxu0
        %v534 = vadd.f32 0.0, %v533
        %v535 = vpop.f32.mrf.mxu0
        %v536 = vadd.f32 0.0, %v535
        %537 = vmatprep.mubr.f32.mxu0 0.0
        %538 = vmatmul.mubr.f32.gmra.mxu0 %v310
        %v539 = vpop.f32.mrf.mxu0
        %v540 = vadd.f32 0.0, %v539
        %v541 = vpop.f32.mrf.mxu0
        %v542 = vadd.f32 0.0, %v541
        %543 = vmatprep.mubr.f32.mxu0 0.0
        %544 = vmatmul.mubr.f32.gmra.mxu0 %v313
        %v545 = vpop.f32.mrf.mxu0
        %v546 = vadd.f32 0.0, %v545
        %v547 = vpop.f32.mrf.mxu0
        %v548 = vadd.f32 0.0, %v547
        %549 = vmatprep.mubr.f32.mxu0 0.0
        %550 = vmatmul.mubr.f32.gmra.mxu0 %v316
        %v551 = vpop.f32.mrf.mxu0
        %v552 = vadd.f32 0.0, %v551
        %v553 = vpop.f32.mrf.mxu0
        %v554 = vadd.f32 0.0, %v553
        %555 = vmatprep.mubr.f32.mxu0 0.0
        %556 = vmatmul.mubr.f32.gmra.mxu0 %v319
        %v557 = vpop.f32.mrf.mxu0
        %v558 = vadd.f32 0.0, %v557
        %v559 = vpop.f32.mrf.mxu0
        %v560 = vadd.f32 0.0, %v559
        %561 = vmatprep.mubr.f32.mxu0 0.0
        %562 = vmatmul.mubr.f32.gmra.mxu0 %v322
        %v563 = vpop.f32.mrf.mxu0
        %v564 = vadd.f32 0.0, %v563
        %v565 = vpop.f32.mrf.mxu0
        %v566 = vadd.f32 0.0, %v565
        %567 = vmatprep.mubr.f32.mxu0 0.0
        %568 = vmatmul.mubr.f32.gmra.mxu0 %v325
        %v569 = vpop.f32.mrf.mxu0
        %v570 = vadd.f32 0.0, %v569
        %v571 = vpop.f32.mrf.mxu0
        %v572 = vadd.f32 0.0, %v571
        %573 = vmatprep.mubr.f32.mxu0 0.0
        %574 = vmatmul.mubr.f32.gmra.mxu0 %v328
        %v575 = vpop.f32.mrf.mxu0
        %v576 = vadd.f32 0.0, %v575
        %v577 = vpop.f32.mrf.mxu0
        %v578 = vadd.f32 0.0, %v577
        %579 = vmatprep.mubr.f32.mxu0 0.0
        %580 = vmatmul.mubr.f32.gmra.mxu0 %v331
        %v581 = vpop.f32.mrf.mxu0
        %v582 = vadd.f32 0.0, %v581
        %v583 = vpop.f32.mrf.mxu0
        %v584 = vadd.f32 0.0, %v583
        %585 = vmatprep.mubr.f32.mxu0 0.0
        %586 = vmatmul.mubr.f32.gmra.mxu0 %v334
        %v587 = vpop.f32.mrf.mxu0
        %v588 = vadd.f32 0.0, %v587
        %v589 = vpop.f32.mrf.mxu0
        %v590 = vadd.f32 0.0, %v589
        %591 = vmatprep.mubr.f32.mxu0 0.0
        %592 = vmatmul.mubr.f32.gmra.mxu0 %v337
        %v593 = vpop.f32.mrf.mxu0
        %v594 = vadd.f32 0.0, %v593
        %v595 = vpop.f32.mrf.mxu0
        %v596 = vadd.f32 0.0, %v595
        %597 = vmatprep.mubr.f32.mxu0 0.0
        %598 = vmatmul.mubr.f32.gmra.mxu0 %v340
        %v599 = vpop.f32.mrf.mxu0
        %v600 = vadd.f32 0.0, %v599
        %v601 = vpop.f32.mrf.mxu0
        %v602 = vadd.f32 0.0, %v601
        %603 = vmatprep.mubr.f32.mxu0 0.0
        %604 = vmatmul.mubr.f32.gmra.mxu0 %v343
        %v605 = vpop.f32.mrf.mxu0
        %v606 = vadd.f32 0.0, %v605
        %v607 = vpop.f32.mrf.mxu0
        %v608 = vadd.f32 0.0, %v607
        %609 = vmatprep.mubr.f32.mxu0 0.0
        %610 = vmatmul.mubr.f32.gmra.mxu0 %v346
        %v611 = vpop.f32.mrf.mxu0
        %v612 = vadd.f32 0.0, %v611
        %v613 = vpop.f32.mrf.mxu0
        %v614 = vadd.f32 0.0, %v613
        %615 = vmatprep.mubr.f32.mxu0 0.0
        %616 = vmatmul.mubr.f32.gmra.mxu0 %v349
        %v617 = vpop.f32.mrf.mxu0
        %v618 = vadd.f32 0.0, %v617
        %v619 = vpop.f32.mrf.mxu0
        %v620 = vadd.f32 0.0, %v619
        %621 = vmatprep.mubr.f32.mxu0 0.0
        %622 = vmatmul.mubr.f32.gmra.mxu0 %v352
        %v623 = vpop.f32.mrf.mxu0
        %v624 = vadd.f32 0.0, %v623
        %v625 = vpop.f32.mrf.mxu0
        %v626 = vadd.f32 0.0, %v625
        %627 = vmatprep.mubr.f32.mxu0 0.0
        %628 = vmatmul.mubr.f32.gmra.mxu0 %v355
        %v629 = vpop.f32.mrf.mxu0
        %v630 = vadd.f32 0.0, %v629
        %v631 = vpop.f32.mrf.mxu0
        %v632 = vadd.f32 0.0, %v631
        %633 = vmatprep.mubr.f32.mxu0 0.0
        %634 = vmatmul.mubr.f32.gmra.mxu0 %v358
        %v635 = vpop.f32.mrf.mxu0
        %v636 = vadd.f32 0.0, %v635
        %v637 = vpop.f32.mrf.mxu0
        %v638 = vadd.f32 0.0, %v637
        %639 = vmatprep.mubr.f32.mxu0 0.0
        %640 = vmatmul.mubr.f32.gmra.mxu0 %v361
        %v641 = vpop.f32.mrf.mxu0
        %v642 = vadd.f32 0.0, %v641
        %v643 = vpop.f32.mrf.mxu0
        %v644 = vadd.f32 0.0, %v643
        %645 = vmatprep.mubr.f32.mxu0 0.0
        %646 = vmatmul.mubr.f32.gmra.mxu0 %v364
        %v647 = vpop.f32.mrf.mxu0
        %v648 = vadd.f32 0.0, %v647
        %v649 = vpop.f32.mrf.mxu0
        %v650 = vadd.f32 0.0, %v649
        %651 = vmatprep.mubr.f32.mxu0 0.0
        %652 = vmatmul.mubr.f32.gmra.mxu0 %v367
        %v653 = vpop.f32.mrf.mxu0
        %v654 = vadd.f32 0.0, %v653
        %v655 = vpop.f32.mrf.mxu0
        %v656 = vadd.f32 0.0, %v655
        %657 = vmatprep.mubr.f32.mxu0 0.0
        %658 = vmatmul.mubr.f32.gmra.mxu0 %v370
        %v659 = vpop.f32.mrf.mxu0
        %v660 = vadd.f32 0.0, %v659
        %v661 = vpop.f32.mrf.mxu0
        %v662 = vadd.f32 0.0, %v661
        %663 = vmatprep.mubr.f32.mxu0 0.0
        %664 = vmatmul.mubr.f32.gmra.mxu0 %v373
        %v665 = vpop.f32.mrf.mxu0
        %v666 = vadd.f32 0.0, %v665
        %v667 = vpop.f32.mrf.mxu0
        %v668 = vadd.f32 0.0, %v667
        %669 = vmatprep.mubr.f32.mxu0 0.0
        %670 = vmatmul.mubr.f32.gmra.mxu0 %v376
        %v671 = vpop.f32.mrf.mxu0
        %v672 = vadd.f32 0.0, %v671
        %v673 = vpop.f32.mrf.mxu0
        %v674 = vadd.f32 0.0, %v673
        %675 = vmatprep.mubr.f32.mxu0 0.0
        %676 = vmatmul.mubr.f32.gmra.mxu0 %v379
        %v677 = vpop.f32.mrf.mxu0
        %v678 = vadd.f32 0.0, %v677
        %v679 = vpop.f32.mrf.mxu0
        %v680 = vadd.f32 0.0, %v679
        %681 = vmatprep.mubr.f32.mxu0 0.0
        %682 = vmatmul.mubr.f32.gmra.mxu0 %v382
        %v683 = vpop.f32.mrf.mxu0
        %v684 = vadd.f32 0.0, %v683
        %v685 = vpop.f32.mrf.mxu0
        %v686 = vadd.f32 0.0, %v685
        %687 = vmatprep.mubr.f32.mxu0 0.0
        %688 = vmatmul.mubr.f32.gmra.mxu0 %v385
        %v689 = vpop.f32.mrf.mxu0
        %v690 = vadd.f32 0.0, %v689
        %v691 = vpop.f32.mrf.mxu0
        %v692 = vadd.f32 0.0, %v691
        %693 = vmatprep.mubr.f32.mxu0 0.0
        %694 = vmatmul.mubr.f32.gmra.mxu0 %v388
        %v695 = vpop.f32.mrf.mxu0
        %v696 = vadd.f32 0.0, %v695
        %v697 = vpop.f32.mrf.mxu0
        %v698 = vadd.f32 0.0, %v697
        %699 = vmatprep.mubr.f32.mxu0 0.0
        %700 = vmatmul.mubr.f32.gmra.mxu0 %v391
        %v701 = vpop.f32.mrf.mxu0
        %v702 = vadd.f32 0.0, %v701
        %v703 = vpop.f32.mrf.mxu0
        %v704 = vadd.f32 0.0, %v703
        %705 = vmatprep.mubr.f32.mxu0 0.0
        %706 = vmatmul.mubr.f32.gmra.mxu0 %v394
        %v707 = vpop.f32.mrf.mxu0
        %v708 = vadd.f32 0.0, %v707
        %v709 = vpop.f32.mrf.mxu0
        %v710 = vadd.f32 0.0, %v709
        %711 = vmatprep.mubr.f32.mxu0 0.0
        %712 = vmatmul.mubr.f32.gmra.mxu0 %v397
        %v713 = vpop.f32.mrf.mxu0
        %v714 = vadd.f32 0.0, %v713
        %v715 = vpop.f32.mrf.mxu0
        %v716 = vadd.f32 0.0, %v715
        %717 = vmatprep.mubr.f32.mxu0 0.0
        %718 = vmatmul.mubr.f32.gmra.mxu0 %v400
        %v719 = vpop.f32.mrf.mxu0
        %v720 = vadd.f32 0.0, %v719
        %v721 = vpop.f32.mrf.mxu0
        %v722 = vadd.f32 0.0, %v721
        %723 = vmatprep.mubr.f32.mxu0 0.0
        %724 = vmatmul.mubr.f32.gmra.mxu0 %v403
        %v725 = vpop.f32.mrf.mxu0
        %v726 = vadd.f32 0.0, %v725
        %v727 = vpop.f32.mrf.mxu0
        %v728 = vadd.f32 0.0, %v727
        %729 = vmatprep.mubr.f32.mxu0 0.0
        %730 = vmatmul.mubr.f32.gmra.mxu0 %v406
        %v731 = vpop.f32.mrf.mxu0
        %v732 = vadd.f32 0.0, %v731
        %v733 = vpop.f32.mrf.mxu0
        %v734 = vadd.f32 0.0, %v733
        %735 = vmatprep.mubr.f32.mxu0 0.0
        %736 = vmatmul.mubr.f32.gmra.mxu0 %v409
        %v737 = vpop.f32.mrf.mxu0
        %v738 = vadd.f32 0.0, %v737
        %v739 = vpop.f32.mrf.mxu0
        %v740 = vadd.f32 0.0, %v739
        %741 = vmatprep.mubr.f32.mxu0 0.0
        %742 = vmatmul.mubr.f32.gmra.mxu0 %v412
        %v743 = vpop.f32.mrf.mxu0
        %v744 = vadd.f32 0.0, %v743
        %v745 = vpop.f32.mrf.mxu0
        %v746 = vadd.f32 0.0, %v745
        %747 = vmatprep.mubr.f32.mxu0 0.0
        %748 = vmatmul.mubr.f32.gmra.mxu0 %v415
        %v749 = vpop.f32.mrf.mxu0
        %v750 = vadd.f32 0.0, %v749
        %v751 = vpop.f32.mrf.mxu0
        %v752 = vadd.f32 0.0, %v751
        %753 = vmatprep.mubr.f32.mxu0 0.0
        %754 = vmatmul.mubr.f32.gmra.mxu0 %v418
        %v755 = vpop.f32.mrf.mxu0
        %v756 = vadd.f32 0.0, %v755
        %v757 = vpop.f32.mrf.mxu0
        %v758 = vadd.f32 0.0, %v757
        %759 = vmatprep.mubr.f32.mxu0 0.0
        %760 = vmatmul.mubr.f32.gmra.mxu0 %v421
        %v761 = vpop.f32.mrf.mxu0
        %v762 = vadd.f32 0.0, %v761
        %v763 = vpop.f32.mrf.mxu0
        %v764 = vadd.f32 0.0, %v763
        %765 = vmatprep.mubr.f32.mxu0 0.0
        %766 = vmatmul.mubr.f32.gmra.mxu0 %v424
        %v767 = vpop.f32.mrf.mxu0
        %v768 = vadd.f32 0.0, %v767
        %v769 = vpop.f32.mrf.mxu0
        %v770 = vadd.f32 0.0, %v769
        %771 = vmatprep.mubr.f32.mxu0 0.0
        %772 = vmatmul.mubr.f32.gmra.mxu0 %v427
        %v773 = vpop.f32.mrf.mxu0
        %v774 = vadd.f32 0.0, %v773
        %v775 = vpop.f32.mrf.mxu0
        %v776 = vadd.f32 0.0, %v775
        %777 = vmatprep.mubr.f32.mxu0 0.0
        %778 = vmatmul.mubr.f32.gmra.mxu0 %v430
        %v779 = vpop.f32.mrf.mxu0
        %v780 = vadd.f32 0.0, %v779
        %v781 = vpop.f32.mrf.mxu0
        %v782 = vadd.f32 0.0, %v781
        %783 = vmatprep.mubr.f32.mxu0 0.0
        %784 = vmatmul.mubr.f32.gmra.mxu0 %v433
        %v785 = vpop.f32.mrf.mxu0
        %v786 = vadd.f32 0.0, %v785
        %v787 = vpop.f32.mrf.mxu0
        %v788 = vadd.f32 0.0, %v787
        %789 = vmatprep.mubr.f32.mxu0 0.0
        %790 = vmatmul.mubr.f32.gmra.mxu0 %v436
        %v791 = vpop.f32.mrf.mxu0
        %v792 = vadd.f32 0.0, %v791
        %v793 = vpop.f32.mrf.mxu0
        %v794 = vadd.f32 0.0, %v793
        %795 = vdwg.mxu0
        %v796 = vmax.f32 %v606, %v608
        %797 = vmax.xlane.f32.xlu0 %v796
        %v798 = vpop.xlane.xlu0 %797
        %v799 = vmax.f32 %v612, %v614
        %800 = vmax.xlane.f32.xlu0 %v799
        %v801 = vpop.xlane.xlu0 %800
        %v802 = vmax.f32 %v618, %v620
        %803 = vmax.xlane.f32.xlu0 %v802
        %v804 = vpop.xlane.xlu0 %803
        %v805 = vmax.f32 %v624, %v626
        %806 = vmax.xlane.f32.xlu0 %v805
        %v807 = vpop.xlane.xlu0 %806
        %v808 = vmax.f32 %v630, %v632
        %809 = vmax.xlane.f32.xlu0 %v808
        %v810 = vpop.xlane.xlu0 %809
        %v811 = vmax.f32 %v636, %v638
        %812 = vmax.xlane.f32.xlu0 %v811
        %v813 = vpop.xlane.xlu0 %812
        %v814 = vmax.f32 %v642, %v644
        %815 = vmax.xlane.f32.xlu0 %v814
        %v816 = vpop.xlane.xlu0 %815
        %v817 = vmax.f32 %v648, %v650
        %818 = vmax.xlane.f32.xlu0 %v817
        %v819 = vpop.xlane.xlu0 %818
        %v820 = vmax.f32 %v654, %v656
        %821 = vmax.xlane.f32.xlu0 %v820
        %v822 = vpop.xlane.xlu0 %821
        %v823 = vmax.f32 %v660, %v662
        %824 = vmax.xlane.f32.xlu0 %v823
        %v825 = vpop.xlane.xlu0 %824
        %v826 = vmax.f32 %v666, %v668
        %827 = vmax.xlane.f32.xlu0 %v826
        %v828 = vpop.xlane.xlu0 %827
        %v829 = vmax.f32 %v672, %v674
        %830 = vmax.xlane.f32.xlu0 %v829
        %v831 = vpop.xlane.xlu0 %830
        %v832 = vmax.f32 %v678, %v680
        %833 = vmax.xlane.f32.xlu0 %v832
        %v834 = vpop.xlane.xlu0 %833
        %v835 = vmax.f32 %v684, %v686
        %836 = vmax.xlane.f32.xlu0 %v835
        %v837 = vpop.xlane.xlu0 %836
        %v838 = vmax.f32 %v690, %v692
        %839 = vmax.xlane.f32.xlu0 %v838
        %v840 = vpop.xlane.xlu0 %839
        %v841 = vmax.f32 %v696, %v698
        %842 = vmax.xlane.f32.xlu0 %v841
        %v843 = vpop.xlane.xlu0 %842
        %v844 = vsub.f32 %v606, %v798
        %v845 = vsub.f32 %v608, %v798
        %v846 = vsub.f32 %v612, %v801
        %v847 = vsub.f32 %v614, %v801
        %v848 = vsub.f32 %v618, %v804
        %v849 = vsub.f32 %v620, %v804
        %v850 = vsub.f32 %v624, %v807
        %v851 = vsub.f32 %v626, %v807
        %v852 = vsub.f32 %v630, %v810
        %v853 = vsub.f32 %v632, %v810
        %v854 = vsub.f32 %v636, %v813
        %v855 = vsub.f32 %v638, %v813
        %v856 = vsub.f32 %v642, %v816
        %v857 = vsub.f32 %v644, %v816
        %v858 = vsub.f32 %v648, %v819
        %v859 = vsub.f32 %v650, %v819
        %v860 = vsub.f32 %v654, %v822
        %v861 = vsub.f32 %v656, %v822
        %v862 = vsub.f32 %v660, %v825
        %v863 = vsub.f32 %v662, %v825
        %v864 = vsub.f32 %v666, %v828
        %v865 = vsub.f32 %v668, %v828
        %v866 = vsub.f32 %v672, %v831
        %v867 = vsub.f32 %v674, %v831
        %v868 = vsub.f32 %v678, %v834
        %v869 = vsub.f32 %v680, %v834
        %v870 = vsub.f32 %v684, %v837
        %v871 = vsub.f32 %v686, %v837
        %v872 = vsub.f32 %v690, %v840
        %v873 = vsub.f32 %v692, %v840
        %v874 = vsub.f32 %v696, %v843
        %v875 = vsub.f32 %v698, %v843
        %v876 = vmul.f32 %v844, 1.442695
        %v877 = vpow.pop %v876
        %v878 = vmul.f32 %v845, 1.442695
        %v879 = vpow.pop %v878
        %v880 = vmul.f32 %v846, 1.442695
        %v881 = vpow.pop %v880
        %v882 = vmul.f32 %v847, 1.442695
        %v883 = vpow.pop %v882
        %v884 = vmul.f32 %v848, 1.442695
        %v885 = vpow.pop %v884
        %v886 = vmul.f32 %v849, 1.442695
        %v887 = vpow.pop %v886
        %v888 = vmul.f32 %v850, 1.442695
        %v889 = vpow.pop %v888
        %v890 = vmul.f32 %v851, 1.442695
        %v891 = vpow.pop %v890
        %v892 = vmul.f32 %v852, 1.442695
        %v893 = vpow.pop %v892
        %v894 = vmul.f32 %v853, 1.442695
        %v895 = vpow.pop %v894
        %v896 = vmul.f32 %v854, 1.442695
        %v897 = vpow.pop %v896
        %v898 = vmul.f32 %v855, 1.442695
        %v899 = vpow.pop %v898
        %v900 = vmul.f32 %v856, 1.442695
        %v901 = vpow.pop %v900
        %v902 = vmul.f32 %v857, 1.442695
        %v903 = vpow.pop %v902
        %v904 = vmul.f32 %v858, 1.442695
        %v905 = vpow.pop %v904
        %v906 = vmul.f32 %v859, 1.442695
        %v907 = vpow.pop %v906
        %v908 = vmul.f32 %v860, 1.442695
        %v909 = vpow.pop %v908
        %v910 = vmul.f32 %v861, 1.442695
        %v911 = vpow.pop %v910
        %v912 = vmul.f32 %v862, 1.442695
        %v913 = vpow.pop %v912
        %v914 = vmul.f32 %v863, 1.442695
        %v915 = vpow.pop %v914
        %v916 = vmul.f32 %v864, 1.442695
        %v917 = vpow.pop %v916
        %v918 = vmul.f32 %v865, 1.442695
        %v919 = vpow.pop %v918
        %v920 = vmul.f32 %v866, 1.442695
        %v921 = vpow.pop %v920
        %v922 = vmul.f32 %v867, 1.442695
        %v923 = vpow.pop %v922
        %v924 = vmul.f32 %v868, 1.442695
        %v925 = vpow.pop %v924
        %v926 = vmul.f32 %v869, 1.442695
        %v927 = vpow.pop %v926
        %v928 = vmul.f32 %v870, 1.442695
        %v929 = vpow.pop %v928
        %v930 = vmul.f32 %v871, 1.442695
        %v931 = vpow.pop %v930
        %v932 = vmul.f32 %v872, 1.442695
        %v933 = vpow.pop %v932
        %v934 = vmul.f32 %v873, 1.442695
        %v935 = vpow.pop %v934
        %v936 = vmul.f32 %v874, 1.442695
        %v937 = vpow.pop %v936
        %v938 = vmul.f32 %v875, 1.442695
        %v939 = vpow.pop %v938
        %v940 = vadd.f32 %v877, %v879
        %941 = vadd.xlane.f32.xlu0 %v940
        %v942 = vpop.xlane.xlu0 %941
        %v943 = vadd.f32 %v881, %v883
        %944 = vadd.xlane.f32.xlu0 %v943
        %v945 = vpop.xlane.xlu0 %944
        %v946 = vadd.f32 %v885, %v887
        %947 = vadd.xlane.f32.xlu0 %v946
        %v948 = vpop.xlane.xlu0 %947
        %v949 = vadd.f32 %v889, %v891
        %950 = vadd.xlane.f32.xlu0 %v949
        %v951 = vpop.xlane.xlu0 %950
        %v952 = vadd.f32 %v893, %v895
        %953 = vadd.xlane.f32.xlu0 %v952
        %v954 = vpop.xlane.xlu0 %953
        %v955 = vadd.f32 %v897, %v899
        %956 = vadd.xlane.f32.xlu0 %v955
        %v957 = vpop.xlane.xlu0 %956
        %v958 = vadd.f32 %v901, %v903
        %959 = vadd.xlane.f32.xlu0 %v958
        %v960 = vpop.xlane.xlu0 %959
        %v961 = vadd.f32 %v905, %v907
        %962 = vadd.xlane.f32.xlu0 %v961
        %v963 = vpop.xlane.xlu0 %962
        %v964 = vadd.f32 %v909, %v911
        %965 = vadd.xlane.f32.xlu0 %v964
        %v966 = vpop.xlane.xlu0 %965
        %v967 = vadd.f32 %v913, %v915
        %968 = vadd.xlane.f32.xlu0 %v967
        %v969 = vpop.xlane.xlu0 %968
        %v970 = vadd.f32 %v917, %v919
        %971 = vadd.xlane.f32.xlu0 %v970
        %v972 = vpop.xlane.xlu0 %971
        %v973 = vadd.f32 %v921, %v923
        %974 = vadd.xlane.f32.xlu0 %v973
        %v975 = vpop.xlane.xlu0 %974
        %v976 = vadd.f32 %v925, %v927
        %977 = vadd.xlane.f32.xlu0 %v976
        %v978 = vpop.xlane.xlu0 %977
        %v979 = vadd.f32 %v929, %v931
        %980 = vadd.xlane.f32.xlu0 %v979
        %v981 = vpop.xlane.xlu0 %980
        %v982 = vadd.f32 %v933, %v935
        %983 = vadd.xlane.f32.xlu0 %v982
        %v984 = vpop.xlane.xlu0 %983
        %v985 = vadd.f32 %v937, %v939
        %986 = vadd.xlane.f32.xlu0 %v985
        %v987 = vpop.xlane.xlu0 %986
        %v988 = vrcp.pop %v942
        %v989 = vrcp.pop %v945
        %v990 = vrcp.pop %v948
        %v991 = vrcp.pop %v951
        %v992 = vrcp.pop %v954
        %v993 = vrcp.pop %v957
        %v994 = vrcp.pop %v960
        %v995 = vrcp.pop %v963
        %v996 = vrcp.pop %v966
        %v997 = vrcp.pop %v969
        %v998 = vrcp.pop %v972
        %v999 = vrcp.pop %v975
        %v1000 = vrcp.pop %v978
        %v1001 = vrcp.pop %v981
        %v1002 = vrcp.pop %v984
        %v1003 = vrcp.pop %v987
        %v1004 = vpack.c.bf16 %v881, %v877
        %v1005 = vpack.c.bf16 %v883, %v879
        %v1006 = vpack.c.bf16 %v889, %v885
        %v1007 = vpack.c.bf16 %v891, %v887
        %v1008 = vpack.c.bf16 %v897, %v893
        %v1009 = vpack.c.bf16 %v899, %v895
        %v1010 = vpack.c.bf16 %v905, %v901
        %v1011 = vpack.c.bf16 %v907, %v903
        %v1012 = vpack.c.bf16 %v913, %v909
        %v1013 = vpack.c.bf16 %v915, %v911
        %v1014 = vpack.c.bf16 %v921, %v917
        %v1015 = vpack.c.bf16 %v923, %v919
        %v1016 = vpack.c.bf16 %v929, %v925
        %v1017 = vpack.c.bf16 %v931, %v927
        %v1018 = vpack.c.bf16 %v937, %v933
        %v1019 = vpack.c.bf16 %v939, %v935
        %v1020 = vpack.c.bf16 %v708, %v702
        %v1021 = vpack.c.bf16 %v710, %v704
        %v1022 = vpack.c.bf16 %v720, %v714
        %v1023 = vpack.c.bf16 %v722, %v716
        %v1024 = vpack.c.bf16 %v732, %v726
        %v1025 = vpack.c.bf16 %v734, %v728
        %v1026 = vpack.c.bf16 %v744, %v738
        %v1027 = vpack.c.bf16 %v746, %v740
        %v1028 = vpack.c.bf16 %v756, %v750
        %v1029 = vpack.c.bf16 %v758, %v752
        %v1030 = vpack.c.bf16 %v768, %v762
        %v1031 = vpack.c.bf16 %v770, %v764
        %v1032 = vpack.c.bf16 %v780, %v774
        %v1033 = vpack.c.bf16 %v782, %v776
        %v1034 = vpack.c.bf16 %v792, %v786
        %v1035 = vpack.c.bf16 %v794, %v788
        %1036 = vmatprep.subr.bf16.mxu0 %v1035
        %1037 = vmatpush1.bf16.xpose.msra.mxu0 %v1034
        %1038 = vmatprep.subr.bf16.mxu0 %v1033
        %1039 = vmatpush1.bf16.xpose.msra.mxu0 %v1032
        %1040 = vmatprep.subr.bf16.mxu0 %v1031
        %1041 = vmatpush1.bf16.xpose.msra.mxu0 %v1030
        %1042 = vmatprep.subr.bf16.mxu0 %v1029
        %1043 = vmatpush1.bf16.xpose.msra.mxu0 %v1028
        %1044 = vmatprep.subr.bf16.mxu0 %v1027
        %1045 = vmatpush1.bf16.xpose.msra.mxu0 %v1026
        %1046 = vmatprep.subr.bf16.mxu0 %v1025
        %1047 = vmatpush1.bf16.xpose.msra.mxu0 %v1024
        %1048 = vmatprep.subr.bf16.mxu0 %v1023
        %1049 = vmatpush1.bf16.xpose.msra.mxu0 %v1022
        %1050 = vmatprep.subr.bf16.mxu0 %v1021
        %1051 = vmatpush1.bf16.xpose.msra.mxu0 %v1020
        %1052 = vmatprep.subr.bf16.mxu0 0
        %1053 = vmatpush2.bf16.xpose.msra.mxu0 0
        %1054 = vmatprep.subr.bf16.mxu0 0
        %1055 = vmatpush2.bf16.xpose.msra.mxu0 0
        %1056 = vmatprep.subr.bf16.mxu0 0
        %1057 = vmatpush2.bf16.xpose.msra.mxu0 0
        %1058 = vmatprep.subr.bf16.mxu0 0
        %1059 = vmatpush2.bf16.xpose.msra.mxu0 0
        %1060 = vmatprep.subr.bf16.mxu0 0
        %1061 = vmatpush2.bf16.xpose.msra.mxu0 0
        %1062 = vmatprep.subr.bf16.mxu0 0
        %1063 = vmatpush2.bf16.xpose.msra.mxu0 0
        %1064 = vmatprep.subr.bf16.mxu0 0
        %1065 = vmatpush2.bf16.xpose.msra.mxu0 0
        %1066 = vmatprep.subr.bf16.mxu0 0
        %1067 = vmatpush2.bf16.xpose.msra.mxu0 0
        %1068 = vmatprep.mubr.bf16.mxu0 %v1005
        %1069 = vmatmul.mubr.bf16.gmra.mxu0 %v1004
        %v1070 = vpop.f32.mrf.mxu0
        %v1071 = vadd.f32 0.0, %v1070
        %v1072 = vpop.f32.mrf.mxu0
        %v1073 = vpop.f32.mrf.mxu0
        %v1074 = vadd.f32 0.0, %v1073
        %v1075 = vpop.f32.mrf.mxu0
        %1076 = vmatprep.mubr.bf16.mxu0 %v1007
        %1077 = vmatmul.mubr.bf16.gmra.mxu0 %v1006
        %v1078 = vpop.f32.mrf.mxu0
        %v1079 = vadd.f32 0.0, %v1078
        %v1080 = vpop.f32.mrf.mxu0
        %v1081 = vpop.f32.mrf.mxu0
        %v1082 = vadd.f32 0.0, %v1081
        %v1083 = vpop.f32.mrf.mxu0
        %1084 = vmatprep.mubr.bf16.mxu0 %v1009
        %1085 = vmatmul.mubr.bf16.gmra.mxu0 %v1008
        %v1086 = vpop.f32.mrf.mxu0
        %v1087 = vadd.f32 0.0, %v1086
        %v1088 = vpop.f32.mrf.mxu0
        %v1089 = vpop.f32.mrf.mxu0
        %v1090 = vadd.f32 0.0, %v1089
        %v1091 = vpop.f32.mrf.mxu0
        %1092 = vmatprep.mubr.bf16.mxu0 %v1011
        %1093 = vmatmul.mubr.bf16.gmra.mxu0 %v1010
        %v1094 = vpop.f32.mrf.mxu0
        %v1095 = vadd.f32 0.0, %v1094
        %v1096 = vpop.f32.mrf.mxu0
        %v1097 = vpop.f32.mrf.mxu0
        %v1098 = vadd.f32 0.0, %v1097
        %v1099 = vpop.f32.mrf.mxu0
        %1100 = vmatprep.mubr.bf16.mxu0 %v1013
        %1101 = vmatmul.mubr.bf16.gmra.mxu0 %v1012
        %v1102 = vpop.f32.mrf.mxu0
        %v1103 = vadd.f32 0.0, %v1102
        %v1104 = vpop.f32.mrf.mxu0
        %v1105 = vpop.f32.mrf.mxu0
        %v1106 = vadd.f32 0.0, %v1105
        %v1107 = vpop.f32.mrf.mxu0
        %1108 = vmatprep.mubr.bf16.mxu0 %v1015
        %1109 = vmatmul.mubr.bf16.gmra.mxu0 %v1014
        %v1110 = vpop.f32.mrf.mxu0
        %v1111 = vadd.f32 0.0, %v1110
        %v1112 = vpop.f32.mrf.mxu0
        %v1113 = vpop.f32.mrf.mxu0
        %v1114 = vadd.f32 0.0, %v1113
        %v1115 = vpop.f32.mrf.mxu0
        %1116 = vmatprep.mubr.bf16.mxu0 %v1017
        %1117 = vmatmul.mubr.bf16.gmra.mxu0 %v1016
        %v1118 = vpop.f32.mrf.mxu0
        %v1119 = vadd.f32 0.0, %v1118
        %v1120 = vpop.f32.mrf.mxu0
        %v1121 = vpop.f32.mrf.mxu0
        %v1122 = vadd.f32 0.0, %v1121
        %v1123 = vpop.f32.mrf.mxu0
        %1124 = vmatprep.mubr.bf16.mxu0 %v1019
        %1125 = vmatmul.mubr.bf16.gmra.mxu0 %v1018
        %v1126 = vpop.f32.mrf.mxu0
        %v1127 = vadd.f32 0.0, %v1126
        %v1128 = vpop.f32.mrf.mxu0
        %v1129 = vpop.f32.mrf.mxu0
        %v1130 = vadd.f32 0.0, %v1129
        %v1131 = vpop.f32.mrf.mxu0
        %1132 = vdwg.mxu0
        %v1133 = vmul.f32 %v1071, %v274
        %v1134 = vmul.f32 %v1074, %v275
        %v1135 = vmul.f32 %v1079, %v276
        %v1136 = vmul.f32 %v1082, %v277
        %v1137 = vmul.f32 %v1087, %v278
        %v1138 = vmul.f32 %v1090, %v279
        %v1139 = vmul.f32 %v1095, %v280
        %v1140 = vmul.f32 %v1098, %v281
        %v1141 = vmul.f32 %v1103, %v282
        %v1142 = vmul.f32 %v1106, %v283
        %v1143 = vmul.f32 %v1111, %v284
        %v1144 = vmul.f32 %v1114, %v285
        %v1145 = vmul.f32 %v1119, %v286
        %v1146 = vmul.f32 %v1122, %v287
        %v1147 = vmul.f32 %v1127, %v288
        %v1148 = vmul.f32 %v1130, %v289
        %v1149 = vmul.f32 %v1133, %v988
        %v1150 = vmul.f32 %v1134, %v989
        %v1151 = vmul.f32 %v1135, %v990
        %v1152 = vmul.f32 %v1136, %v991
        %v1153 = vmul.f32 %v1137, %v992
        %v1154 = vmul.f32 %v1138, %v993
        %v1155 = vmul.f32 %v1139, %v994
        %v1156 = vmul.f32 %v1140, %v995
        %v1157 = vmul.f32 %v1141, %v996
        %v1158 = vmul.f32 %v1142, %v997
        %v1159 = vmul.f32 %v1143, %v998
        %v1160 = vmul.f32 %v1144, %v999
        %v1161 = vmul.f32 %v1145, %v1000
        %v1162 = vmul.f32 %v1146, %v1001
        %v1163 = vmul.f32 %v1147, %v1002
        %v1164 = vmul.f32 %v1148, %v1003
        %1165 = vmatprep.subr.mxu0 0.0
        %1166 = vmatpush1.xpose.msra.mxu0 %v1164
        %1167 = vmatprep.subr.mxu0 0.0
        %1168 = vmatpush1.xpose.msra.mxu0 %v1163
        %1169 = vmatprep.subr.mxu0 0.0
        %1170 = vmatpush1.xpose.msra.mxu0 %v1162
        %1171 = vmatprep.subr.mxu0 0.0
        %1172 = vmatpush1.xpose.msra.mxu0 %v1161
        %1173 = vmatprep.subr.mxu0 0.0
        %1174 = vmatpush1.xpose.msra.mxu0 %v1160
        %1175 = vmatprep.subr.mxu0 0.0
        %1176 = vmatpush1.xpose.msra.mxu0 %v1159
        %1177 = vmatprep.subr.mxu0 0.0
        %1178 = vmatpush1.xpose.msra.mxu0 %v1158
        %1179 = vmatprep.subr.mxu0 0.0
        %1180 = vmatpush1.xpose.msra.mxu0 %v1157
        %1181 = vmatprep.subr.mxu0 0.0
        %1182 = vmatpush1.xpose.msra.mxu0 %v1156
        %1183 = vmatprep.subr.mxu0 0.0
        %1184 = vmatpush1.xpose.msra.mxu0 %v1155
        %1185 = vmatprep.subr.mxu0 0.0
        %1186 = vmatpush1.xpose.msra.mxu0 %v1154
        %1187 = vmatprep.subr.mxu0 0.0
        %1188 = vmatpush1.xpose.msra.mxu0 %v1153
        %1189 = vmatprep.subr.mxu0 0.0
        %1190 = vmatpush1.xpose.msra.mxu0 %v1152
        %1191 = vmatprep.subr.mxu0 0.0
        %1192 = vmatpush1.xpose.msra.mxu0 %v1151
        %1193 = vmatprep.subr.mxu0 0.0
        %1194 = vmatpush1.xpose.msra.mxu0 %v1150
        %1195 = vmatprep.subr.mxu0 0.0
        %1196 = vmatpush1.xpose.msra.mxu0 %v1149
        %1197 = vmatprep.subr.mxu0 0.0
        %1198 = vmatpush2.xpose.msra.mxu0 0.0
        %1199 = vmatprep.subr.mxu0 0.0
        %1200 = vmatpush2.xpose.msra.mxu0 0.0
        %1201 = vmatprep.subr.mxu0 0.0
        %1202 = vmatpush2.xpose.msra.mxu0 0.0
        %1203 = vmatprep.subr.mxu0 0.0
        %1204 = vmatpush2.xpose.msra.mxu0 0.0
        %1205 = vmatprep.subr.mxu0 0.0
        %1206 = vmatpush2.xpose.msra.mxu0 0.0
        %1207 = vmatprep.subr.mxu0 0.0
        %1208 = vmatpush2.xpose.msra.mxu0 0.0
        %1209 = vmatprep.subr.mxu0 0.0
        %1210 = vmatpush2.xpose.msra.mxu0 0.0
        %1211 = vmatprep.subr.mxu0 0.0
        %1212 = vmatpush2.xpose.msra.mxu0 0.0
        %1213 = vmatprep.subr.mxu0 0.0
        %1214 = vmatpush2.xpose.msra.mxu0 0.0
        %1215 = vmatprep.subr.mxu0 0.0
        %1216 = vmatpush2.xpose.msra.mxu0 0.0
        %1217 = vmatprep.subr.mxu0 0.0
        %1218 = vmatpush2.xpose.msra.mxu0 0.0
        %1219 = vmatprep.subr.mxu0 0.0
        %1220 = vmatpush2.xpose.msra.mxu0 0.0
        %1221 = vmatprep.subr.mxu0 0.0
        %1222 = vmatpush2.xpose.msra.mxu0 0.0
        %1223 = vmatprep.subr.mxu0 0.0
        %1224 = vmatpush2.xpose.msra.mxu0 0.0
        %1225 = vmatprep.subr.mxu0 0.0
        %1226 = vmatpush2.xpose.msra.mxu0 0.0
        %1227 = vmatprep.subr.mxu0 0.0
        %1228 = vmatpush2.xpose.msra.mxu0 0.0
        %1229 = vmatprep.mubr.f32.mxu0 0.0
        %1230 = vmatmul.mubr.f32.gmra.mxu0 %v272
        %v1231 = vpop.f32.mrf.mxu0
        %v1232 = vadd.f32 0.0, %v1231
        %v1233 = vpop.f32.mrf.mxu0
        %1234 = vdwg.mxu0
        %v1235 = vpack.c.bf16 %v1232, %v1232
        %v1236 = vpack.c.bf16 %v516, %v510
        %v1237 = vpack.c.bf16 %v518, %v512
        %v1238 = vpack.c.bf16 %v528, %v522
        %v1239 = vpack.c.bf16 %v530, %v524
        %v1240 = vpack.c.bf16 %v540, %v534
        %v1241 = vpack.c.bf16 %v542, %v536
        %v1242 = vpack.c.bf16 %v552, %v546
        %v1243 = vpack.c.bf16 %v554, %v548
        %v1244 = vpack.c.bf16 %v564, %v558
        %v1245 = vpack.c.bf16 %v566, %v560
        %v1246 = vpack.c.bf16 %v576, %v570
        %v1247 = vpack.c.bf16 %v578, %v572
        %v1248 = vpack.c.bf16 %v588, %v582
        %v1249 = vpack.c.bf16 %v590, %v584
        %v1250 = vpack.c.bf16 %v600, %v594
        %v1251 = vpack.c.bf16 %v602, %v596
        %1253 = vset.pattern.permute.xlu0 0
        %1254 = vperm.xlu0 %1253, %v273
        %v1255 = vpop.permute.xlu0 %1254
        %1257 = vmatprep.subr.bf16.mxu0 %v1251
        %1258 = vmatpush1.bf16.msra.mxu0 %v1250
        %1259 = vmatprep.subr.bf16.mxu0 %v1249
        %1260 = vmatpush1.bf16.msra.mxu0 %v1248
        %1261 = vmatprep.subr.bf16.mxu0 %v1247
        %1262 = vmatpush1.bf16.msra.mxu0 %v1246
        %1263 = vmatprep.subr.bf16.mxu0 %v1245
        %1264 = vmatpush1.bf16.msra.mxu0 %v1244
        %1265 = vmatprep.subr.bf16.mxu0 %v1243
        %1266 = vmatpush1.bf16.msra.mxu0 %v1242
        %1267 = vmatprep.subr.bf16.mxu0 %v1241
        %1268 = vmatpush1.bf16.msra.mxu0 %v1240
        %1269 = vmatprep.subr.bf16.mxu0 %v1239
        %1270 = vmatpush1.bf16.msra.mxu0 %v1238
        %1271 = vmatprep.subr.bf16.mxu0 %v1237
        %1272 = vmatpush1.bf16.msra.mxu0 %v1236
        %1273 = vmatprep.subr.bf16.mxu0 0
        %1274 = vmatpush2.bf16.msra.mxu0 0
        %1275 = vmatprep.subr.bf16.mxu0 0
        %1276 = vmatpush2.bf16.msra.mxu0 0
        %1277 = vmatprep.subr.bf16.mxu0 0
        %1278 = vmatpush2.bf16.msra.mxu0 0
        %1279 = vmatprep.subr.bf16.mxu0 0
        %1280 = vmatpush2.bf16.msra.mxu0 0
        %1281 = vmatprep.subr.bf16.mxu0 0
        %1282 = vmatpush2.bf16.msra.mxu0 0
        %1283 = vmatprep.subr.bf16.mxu0 0
        %1284 = vmatpush2.bf16.msra.mxu0 0
        %1285 = vmatprep.subr.bf16.mxu0 0
        %1286 = vmatpush2.bf16.msra.mxu0 0
        %1287 = vmatprep.subr.bf16.mxu0 0
        %1288 = vmatpush2.bf16.msra.mxu0 0
        %1289 = vmatprep.mubr.bf16.mxu0 0
        %1290 = vmatmul.mubr.bf16.gmra.mxu0 %v1235
        %v1291 = vpop.f32.mrf.mxu0
        %v1292 = vadd.f32 %v1255, %v1291
        %v1293 = vpop.f32.mrf.mxu0
        %v1294 = vadd.f32 %v1255, %v1293
        %v1295 = vpop.f32.mrf.mxu0
        %v1296 = vpop.f32.mrf.mxu0
        %1297 = vdwg.mxu0
        %v1300 = vcombine.low %v1292, %v1294
        %1302 = vst [vmem:[%s217] sm:$0xff] %v1300
        %s1303 = sand.u32 %s137, 1
        %s1304 = scalar_lea.sflag [#allocation3], %s1303
        %s1305 = sand.u32 %s137, 1
        %s1306 = smul.addr %s1305, 8
        %s1307 = scalar_lea.vmem [#allocation2], %s1306
        // Predicated region
        $region41: #{tpu_custom_call.1} parent=39 // pred_check
          %p1308 = pneg %p147
        $region42: #{tpu_custom_call.1} parent=39 // pred_check_branch
          %1310 = sbr.rel (%p1308) target = $region44
        $region43: #{tpu_custom_call.1} parent=39 // pred_region
          %s1312 = ssub.s32 128, 128
          %1313 = vsyncadd %s1304, %s1312
          %s1314 = smul.addr %s19, 2
          %s1315 = smul.addr %s1314, 64
          %s1316 = scalar_lea.hbm %s5, %s1315
          %s1318 = sshll.u32 %s1307, 4
          %s1319 = int_to_ptr.vmem [resolvable:$true] %s1318
          %1321 = dma.vmem_to_hbm [thread:$0]  %s1319, 128, %s1316, %s1304
        $region44: #{tpu_custom_call.1} parent=39 // pred_fallthru
          _
      $region40: #{tpu_custom_call.1} parent=5 // pred_fallthru
        _
      %p1322 = scmp.le.s32.totalorder 2, %s14
      // Predicated region
      $region45: #{tpu_custom_call.1} parent=5 // pred_check
        %p1323 = pneg %p1322
      $region46: #{tpu_custom_call.1} parent=5 // pred_check_branch
        %1325 = sbr.rel (%p1323) target = $region48
      $region47: #{tpu_custom_call.1} parent=5 // pred_region
        %s1326 = ssub.s32 %s14, 2
        // Predicated region
        $region49: #{tpu_custom_call.1} parent=47 // pred_check
          %p1327 = pneg %p153
        $region50: #{tpu_custom_call.1} parent=47 // pred_check_branch
          %1329 = sbr.rel (%p1327) target = $region52
        $region51: #{tpu_custom_call.1} parent=47 // pred_region
          %s1330 = sand.u32 %s138, 1
          %s1331 = scalar_lea.sflag [#allocation3], %s1330
          %s1332 = sand.u32 %s138, 1
          %s1333 = smul.addr %s1332, 8
          %s1334 = scalar_lea.vmem [#allocation2], %s1333
          %1335 = dma.done %s1331, 128
        $region52: #{tpu_custom_call.1} parent=47 // pred_fallthru
          _
      $region48: #{tpu_custom_call.1} parent=5 // pred_fallthru
        _
    $region6: #{tpu_custom_call.1} parent=1 // loop_footer
      %s18 = sadd.s32 1, %s14
    $region7: #{tpu_custom_call.1} parent=1 // loop_footer_branch
      %13 = sbr.rel target = $region3
    $region8: #{tpu_custom_call.1} parent=1 // loop_exit
      _
    %1336 = vsyncpa [#allocation3], 1
    %s1337 = scalar_lea.sflag [#allocation3], 1
    %1338 = vsyncpa %s1337, 1

</llo_original>
